<compile_context>
chip_gen: v7x
topology: tpu7x:2x2x1
jax: 0.10.0
libtpu: 0.0.40
codegen_flags: <defaults>
</compile_context>

<pallas_src>
import jax
import jax.numpy as jnp
from jax.experimental import pallas as pl
from jax.experimental.pallas import tpu as pltpu


def _copy_kernel(x_ref, o_ref):
    # Lane-dense identity copy of a (TR, D) tile. The chunk/cat/rearrange of
    # the PyTorch module is a contiguous reshape applied (for free) outside.
    o_ref[...] = x_ref[...]


def _choose_tile_rows(rows: int, D: int, itemsize: int,
                      target_bytes: int = 4 << 20) -> int:
    """Pick a row tile so one buffer is ~target_bytes; multiple of 8 (or full)."""
    row_bytes = max(1, D * itemsize)
    if rows * row_bytes <= target_bytes:
        return rows                      # whole thing in one tile (full extent OK)
    tr = max(8, (target_bytes // row_bytes) // 8 * 8)
    return min(tr, rows)


def upsample_sequence(x: jax.Array, num_chunks: int) -> jax.Array:
    """Pallas equivalent of UpSampleSequence.forward.

    x: (B, L, D) -> (B, L * num_chunks, D // num_chunks).
    """
    B, L, D = x.shape
    assert D % num_chunks == 0, (
        f"input_dim ({D}) must be evenly divisible by num_chunks ({num_chunks})"
    )
    Dc = D // num_chunks

    # Flatten (B, L) -> rows. Contiguous reshape => metadata-only in XLA.
    rows = B * L
    x2 = x.reshape(rows, D)

    TR = _choose_tile_rows(rows, D, x.dtype.itemsize)
    grid = (pl.cdiv(rows, TR),)

    out2 = pl.pallas_call(
        _copy_kernel,
        out_shape=jax.ShapeDtypeStruct((rows, D), x.dtype),
        grid_spec=pltpu.PrefetchScalarGridSpec(
            num_scalar_prefetch=0,
            grid=grid,
            in_specs=[pl.BlockSpec((TR, D), lambda r: (r, 0))],
            out_specs=pl.BlockSpec((TR, D), lambda r: (r, 0)),
        ),
        compiler_params=pltpu.CompilerParams(
            dimension_semantics=("parallel",),
            vmem_limit_bytes=32 * 1024 * 1024,
        ),
    )(x2)

    # The actual "up-sample" is a contiguous reshape -> metadata-only in XLA.
    return out2.reshape(B, L * num_chunks, Dc)


def upsample_sequence_ref(x: jax.Array, num_chunks: int) -> jax.Array:
    """Pure-JAX reference mirroring the PyTorch chunk/cat/rearrange path."""
    B, L, D = x.shape
    Dc = D // num_chunks
    chunks = jnp.split(x[:, :, None, :], num_chunks, axis=-1)
    stacked = jnp.concatenate(chunks, axis=2)          # (B, L, C, Dc)
    return stacked.reshape(B, L * num_chunks, Dc)


if __name__ == "__main__":
    key = jax.random.PRNGKey(0)
    B, L, D = 2, 8, 32
    num_chunks = 4

    x = jax.random.normal(key, (B, L, D), dtype=jnp.float32)

    out = upsample_sequence(x, num_chunks)
    out = jax.block_until_ready(out)

    ref = upsample_sequence_ref(x, num_chunks)
    assert out.shape == (B, L * num_chunks, D // num_chunks), out.shape
    assert jnp.allclose(out, ref), "Pallas output mismatch vs reference"

    print("KERNEL_OK")
</pallas_src>

<mosaic_0001>
module attributes {stable_mosaic.version = 11 : i64} {
  func.func @_copy_kernel(%arg0: i32, %arg1: memref<16x32xf32, #tpu.memory_space<vmem>>, %arg2: memref<16x32xf32, #tpu.memory_space<vmem>>) attributes {dimension_semantics = [#tpu.dimension_semantics<parallel>], iteration_bounds = array<i64: 1>, scalar_prefetch = 0 : i64, scratch_operands = 0 : i64, tpu.core_type = #tpu.core_type<tc>, window_params = [{transform_indices = @transform_0, window_bounds = array<i64: 16, 32>}, {transform_indices = @transform_1, window_bounds = array<i64: 16, 32>}]} {
    %c0 = arith.constant 0 : index
    %c0_0 = arith.constant 0 : index
    %0 = vector.load %arg1[%c0, %c0_0] : memref<16x32xf32, #tpu.memory_space<vmem>>, vector<16x32xf32>
    %c0_1 = arith.constant 0 : index
    %c0_2 = arith.constant 0 : index
    %1 = vector.load %arg2[%c0_1, %c0_2] : memref<16x32xf32, #tpu.memory_space<vmem>>, vector<16x32xf32>
    tpu.vector_store %arg2[%c0_1, %c0_2], %0 {strides = array<i32>} : memref<16x32xf32, #tpu.memory_space<vmem>>, vector<16x32xf32>,
    return
  }
  func.func @transform_0(%arg0: i32) -> (i32, i32) {
    %c0_i32 = arith.constant 0 : i32
    %c0_i32_0 = arith.constant 0 : i32
    return %arg0, %c0_i32 : i32, i32
  }
  func.func @transform_1(%arg0: i32) -> (i32, i32) {
    %c0_i32 = arith.constant 0 : i32
    %c0_i32_0 = arith.constant 0 : i32
    return %arg0, %c0_i32 : i32, i32
  }
}

</mosaic_0001>

<llo_original>
// kernel: tpu_custom_call.1
$region0: #{tpu_custom_call.1}
  #allocation0 [shape = 'u32[]', space=smem, size = 0x4, offset = 0x4, fixed_abs, tag = 'smem constant byte address 0x4 - core index']
  #allocation1 [shape = 'u32[144,128]{1,0:T(1,128)}', space=vmem, size = 0x12000, scoped, tag = 'internal scratch']
  %s0 = inlined_call_operand.hbm [shape: f32[16,32], index: 0, kind: input, shape index: {}]
  %s1 = inlined_call_operand.hbm [shape: f32[16,32], index: 1, kind: output, shape index: {}]
  %s2 = sld [smem:[#allocation0]]
  $region18: #{tpu_custom_call.1} parent=0
    _
  %s4 = ssub.s32 1, %s2
  %s5 = scalar_select 0, %s4, %s2
  $region1: #{tpu_custom_call.1} parent=0
    #allocation2 [shape = 'u8[8192]{0}', space=vmem, size = 0x2000, scoped, tag = 'input window, operand 0, single buffered']
    #allocation3 [shape = 's32[1]{0}', space=sflag, size = 0x4, scoped, tag = 'scoped memory for tpu_custom_call.1']
    #allocation4 [shape = 's32[1]{0}', space=sflag, size = 0x4, scoped, tag = 'scoped memory for tpu_custom_call.1']
    #allocation5 [shape = 'u8[8192]{0}', space=vmem, size = 0x2000, scoped, tag = 'output window, operand 0, single buffered']
    %6 = vsyncpa [#allocation3], 0
    %7 = vsyncpa [#allocation4], 0
    // Predicated region
    $region2: #{tpu_custom_call.1} parent=1 // pred_check
      _
    $region3: #{tpu_custom_call.1} parent=1 // pred_check_branch
      %9 = sbr.rel (0) target = $region5
    $region4: #{tpu_custom_call.1} parent=1 // pred_region
      %s11 = ssub.s32 256, 256
      %12 = vsyncadd [#allocation3], %s11
      %s13 = sshll.u32 [#allocation2], 4
      %s14 = int_to_ptr.vmem [resolvable:$true] %s13
      %19 = dma.hbm_to_vmem [thread:$0]  %s0, 256, %s14, [#allocation3], 128, 128, 8
    $region5: #{tpu_custom_call.1} parent=1 // pred_fallthru
      _
    // Predicated region
    $region6: #{tpu_custom_call.1} parent=1 // pred_check
      _
    $region7: #{tpu_custom_call.1} parent=1 // pred_check_branch
      %21 = sbr.rel (0) target = $region9
    $region8: #{tpu_custom_call.1} parent=1 // pred_region
      %22 = dma.done [#allocation3], 256
    $region9: #{tpu_custom_call.1} parent=1 // pred_fallthru
      _
    %v23 = vld [vmem:[#allocation2] sm:$0xff]
    %v24 = vld [vmem:[#allocation2 + $0x8] sm:$0xff]
    %vm25 = vcmask 261120
    %26 = vst.msk [vmem:[#allocation5] sm:$0xff] %vm25, %v23
    %27 = vst.msk [vmem:[#allocation5 + $0x8] sm:$0xff] %vm25, %v24
    // Predicated region
    $region10: #{tpu_custom_call.1} parent=1 // pred_check
      _
    $region11: #{tpu_custom_call.1} parent=1 // pred_check_branch
      %29 = sbr.rel (0) target = $region13
    $region12: #{tpu_custom_call.1} parent=1 // pred_region
      %s31 = ssub.s32 256, 256
      %32 = vsyncadd [#allocation4], %s31
      %s33 = sshll.u32 [#allocation5], 4
      %s34 = int_to_ptr.vmem [resolvable:$true] %s33
      %39 = dma.vmem_to_hbm [thread:$0]  %s34, 256, %s1, [#allocation4], 128, 128, 8
    $region13: #{tpu_custom_call.1} parent=1 // pred_fallthru
      _
    // Predicated region
    $region14: #{tpu_custom_call.1} parent=1 // pred_check
      _
    $region15: #{tpu_custom_call.1} parent=1 // pred_check_branch
      %41 = sbr.rel (0) target = $region17
    $region16: #{tpu_custom_call.1} parent=1 // pred_region
      %42 = dma.done [#allocation4], 256
    $region17: #{tpu_custom_call.1} parent=1 // pred_fallthru
      _
    %43 = vsyncpa [#allocation3], 1
    %44 = vsyncpa [#allocation4], 1

</llo_original>
